<compile_context>
chip_gen: v7x
topology: tpu7x:2x2x1
jax: 0.10.0
libtpu: 0.0.40
codegen_flags: <defaults>
</compile_context>

<pallas_src>
import functools

import jax
import jax.numpy as jnp
from jax.experimental import pallas as pl
from jax.experimental.pallas import tpu as pltpu


def _smoe_kernel(x_ref, o_ref, *, do_relu, chunk):
    # x_ref block: (1, C, T) in the input's native dtype; o_ref block: (1, 1, T)
    _, C, T = x_ref.shape
    inv_c = 1.0 / C

    def partial_sums(xc):
        # Cast first, then relu / +1e-7 in f32 (1e-7 underflows in bf16;
        # v5e's EUP has no bf16 path).
        xc = xc.astype(jnp.float32)
        if do_relu:
            xc = jnp.maximum(xc, 0.0)
        xc = xc + 1e-7
        return (jnp.sum(xc, axis=0, keepdims=True),
                jnp.sum(jnp.log2(xc), axis=0, keepdims=True))

    sum_x = jnp.zeros((1, T), jnp.float32)
    sum_log = jnp.zeros((1, T), jnp.float32)

    n_full = C // chunk
    rem = C - n_full * chunk

    if n_full > 0:
        if n_full <= 8:
            # Short, fixed trip count: fully unrolled static loop.
            for i in range(n_full):
                a, b = partial_sums(x_ref[0, i * chunk:(i + 1) * chunk, :])
                sum_x = sum_x + a
                sum_log = sum_log + b
        else:
            def body(i, carry):
                sx, sl = carry
                start = pl.multiple_of(i * chunk, chunk)
                a, b = partial_sums(x_ref[0, pl.ds(start, chunk), :])
                return sx + a, sl + b

            sum_x, sum_log = jax.lax.fori_loop(
                0, n_full, body, (sum_x, sum_log), unroll=4)

    if rem > 0:
        a, b = partial_sums(x_ref[0, n_full * chunk:C, :])
        sum_x = sum_x + a
        sum_log = sum_log + b

    m = sum_x * inv_c
    mean_log = sum_log * inv_c
    th = (jnp.log2(m) - mean_log) * m
    o_ref[0] = th.astype(o_ref.dtype)


def _vmem_capacity_bytes() -> int:
    """Per-TensorCore VMEM capacity; conservative fallback (v7x: 64 MiB)."""
    try:
        info = pltpu.get_tpu_info()
        cap = getattr(info, "vmem_capacity_bytes", None)
        if cap:
            return int(cap)
    except Exception:
        pass
    return 64 * 1024 * 1024


def _divisor_tiles(hw_padded: int):
    """All multiples of 128 that evenly divide hw_padded (itself a x128)."""
    n = hw_padded // 128
    return sorted(128 * d for d in range(1, n + 1) if n % d == 0)


def _pick_tile(hw_padded: int, B: int, C: int, itemsize: int,
               vmem_budget: int) -> int:
    """Largest lane-dense tile that (a) keeps the double-buffered input +
    output blocks under the VMEM budget and (b) leaves enough grid steps for
    the pipeline (and both v7x TensorCores)."""
    tiles = _divisor_tiles(hw_padded)

    # Bytes per lane: 2x input buffers (native dtype) + 2x f32 output buffers.
    per_lane = 2 * C * itemsize + 2 * 4
    max_tile_vmem = max(128, (vmem_budget // max(per_lane, 1)) // 128 * 128)

    # Pipelining: aim for >= ~8 total grid steps; if B is odd, keep >= 2 HW
    # tiles (when possible) so both v7x TCs get work on the parallel axes.
    min_hw_tiles = max(-(-8 // max(B, 1)),
                       2 if (B % 2 == 1 and hw_padded > 128) else 1)
    max_tile_pipe = max(128, (hw_padded // min_hw_tiles) // 128 * 128)

    cap = min(max_tile_vmem, max_tile_pipe)
    cands = [t for t in tiles if t <= cap]
    return cands[-1] if cands else 128


def smoe_scale_map(x, run_relu: bool = False):
    """JAX/Pallas equivalent of SMOEScaleMap.forward.

    x: [B, C, H, W] (any float dtype; streamed at native width) -> [B, H, W] f32.
    Note: with run_relu=False and non-positive inputs, log2 yields -inf/NaN,
    exactly as the PyTorch module would.
    """
    B, C, H, W = x.shape
    HW = H * W
    HWp = -(-HW // 128) * 128            # pad spatial axis to lane-dense x128
    itemsize = jnp.dtype(x.dtype).itemsize

    x_flat = jnp.reshape(x, (B, C, HW))
    if HWp != HW:
        # Zero pad is safe: 0 + 1e-7 -> finite log2; pad lanes sliced off below.
        x_flat = jnp.pad(x_flat, ((0, 0), (0, 0), (0, HWp - HW)))

    cap = _vmem_capacity_bytes()
    tile = _pick_tile(HWp, B, C, itemsize, cap // 4)
    chunk = 16 if itemsize == 2 else (32 if itemsize == 1 else 8)

    kernel = functools.partial(_smoe_kernel, do_relu=run_relu, chunk=chunk)

    # Scoped-VMEM limit sized to the actual block footprint (+ headroom),
    # clamped under the physical per-TC capacity.
    needed = 2 * C * tile * itemsize + 2 * tile * 4 + (2 << 20)
    vmem_limit = int(min(cap * 3 // 4, max(needed, 16 << 20)))

    grid = (B, HWp // tile)
    grid_spec = pltpu.PrefetchScalarGridSpec(
        num_scalar_prefetch=0,
        grid=grid,
        in_specs=[pl.BlockSpec((1, C, tile), lambda b, t: (b, 0, t))],
        out_specs=pl.BlockSpec((1, 1, tile), lambda b, t: (b, 0, t)),
    )

    cost = pl.CostEstimate(
        flops=int(5 * B * C * HW),
        transcendentals=int(B * C * HW + B * HW),
        bytes_accessed=int(B * C * HWp * itemsize + B * HWp * 4),
    )

    out = pl.pallas_call(
        kernel,
        grid_spec=grid_spec,
        out_shape=jax.ShapeDtypeStruct((B, 1, HWp), jnp.float32),
        compiler_params=pltpu.CompilerParams(
            dimension_semantics=("parallel", "parallel"),
            vmem_limit_bytes=vmem_limit,
        ),
        cost_estimate=cost,
    )(x_flat)

    out = out[:, 0, :HW]
    return jnp.reshape(out, (B, H, W))


def _smoe_ref(x, run_relu: bool = False):
    """Pure-JAX reference mirroring the PyTorch module."""
    x = x.astype(jnp.float32)
    if run_relu:
        x = jnp.maximum(x, 0.0)
    x = x + 1e-7
    m = jnp.mean(x, axis=1)
    k = jnp.log2(m) - jnp.mean(jnp.log2(x), axis=1)
    return k * m


if __name__ == "__main__":
    key = jax.random.PRNGKey(0)
    k1, k2, k3, k4 = jax.random.split(key, 4)

    # Case 1: raw activations, module applies its internal ReLU (f32).
    B, C, H, W = 2, 4, 16, 16
    x1 = jax.random.normal(k1, (B, C, H, W), dtype=jnp.float32)
    out1 = jax.block_until_ready(smoe_scale_map(x1, run_relu=True))
    ref1 = _smoe_ref(x1, run_relu=True)
    assert out1.shape == (B, H, W)
    assert jnp.allclose(out1, ref1, atol=1e-3, rtol=1e-4)

    # Case 2: already-positive activations, run_relu=False, bf16 input
    # (native-dtype streaming path; cast to f32 happens inside the kernel).
    x2 = jax.random.uniform(k2, (B, C, H, W), minval=0.01, maxval=2.0)
    x2 = x2.astype(jnp.bfloat16)
    out2 = jax.block_until_ready(smoe_scale_map(x2, run_relu=False))
    ref2 = _smoe_ref(x2, run_relu=False)
    assert out2.shape == (B, H, W)
    assert jnp.allclose(out2, ref2, atol=1e-3, rtol=1e-3)

    # Case 3: non-x128 spatial size (padding path) + C > chunk (static
    # unrolled chunk loop + remainder), odd batch.
    B3, C3, H3, W3 = 3, 20, 10, 10
    x3 = jax.random.normal(k3, (B3, C3, H3, W3), dtype=jnp.float32)
    out3 = jax.block_until_ready(smoe_scale_map(x3, run_relu=True))
    ref3 = _smoe_ref(x3, run_relu=True)
    assert out3.shape == (B3, H3, W3)
    assert jnp.allclose(out3, ref3, atol=1e-3, rtol=1e-4)

    # Case 4: large channel count -> lax.fori_loop chunked accumulation path.
    B4, C4, H4, W4 = 1, 80, 8, 8
    x4 = jax.random.uniform(k4, (B4, C4, H4, W4), dtype=jnp.float32,
                            minval=0.01, maxval=2.0)
    out4 = jax.block_until_ready(smoe_scale_map(x4, run_relu=False))
    ref4 = _smoe_ref(x4, run_relu=False)
    assert out4.shape == (B4, H4, W4)
    assert jnp.allclose(out4, ref4, atol=1e-3, rtol=1e-4)

    print("KERNEL_OK")
</pallas_src>

<mosaic_0001>
module attributes {stable_mosaic.version = 11 : i64} {
  func.func @_smoe_kernel(%arg0: i32, %arg1: i32, %arg2: memref<1x4x128xf32, #tpu.memory_space<vmem>>, %arg3: memref<1x1x128xf32, #tpu.memory_space<vmem>>) attributes {dimension_semantics = [#tpu.dimension_semantics<parallel>, #tpu.dimension_semantics<parallel>], iteration_bounds = array<i64: 2, 2>, scalar_prefetch = 0 : i64, scratch_operands = 0 : i64, tpu.core_type = #tpu.core_type<tc>, window_params = [{transform_indices = @transform_0, window_bounds = array<i64: 1, 4, 128>}, {transform_indices = @transform_1, window_bounds = array<i64: 1, 1, 128>}]} {
    %cst = arith.constant 0.000000e+00 : f32
    %0 = vector.broadcast %cst : f32 to vector<1x128xf32>
    %cst_0 = arith.constant 0.000000e+00 : f32
    %1 = vector.broadcast %cst_0 : f32 to vector<1x128xf32>
    %c0 = arith.constant 0 : index
    %c0_1 = arith.constant 0 : index
    %c0_2 = arith.constant 0 : index
    %2 = vector.load %arg2[%c0, %c0_1, %c0_2] : memref<1x4x128xf32, #tpu.memory_space<vmem>>, vector<1x4x128xf32>
    %3 = vector.shape_cast %2 : vector<1x4x128xf32> to vector<4x128xf32>
    %cst_3 = arith.constant 0.000000e+00 : f32
    %4 = vector.broadcast %cst_3 : f32 to vector<4x128xf32>
    %5 = arith.maximumf %3, %4 : vector<4x128xf32>
    %cst_4 = arith.constant 1.000000e-07 : f32
    %6 = vector.broadcast %cst_4 : f32 to vector<4x128xf32>
    %7 = arith.addf %5, %6 : vector<4x128xf32>
    %cst_5 = arith.constant dense<0.000000e+00> : vector<128xf32>
    %8 = vector.multi_reduction <add>, %7, %cst_5 [0] : vector<4x128xf32> to vector<128xf32>
    %9 = vector.shape_cast %8 : vector<128xf32> to vector<1x128xf32>
    %10 = math.log %7 : vector<4x128xf32>
    %cst_6 = arith.constant 2.000000e+00 : f32
    %11 = math.log %cst_6 : f32
    %12 = vector.broadcast %11 : f32 to vector<4x128xf32>
    %13 = arith.divf %10, %12 : vector<4x128xf32>
    %cst_7 = arith.constant dense<0.000000e+00> : vector<128xf32>
    %14 = vector.multi_reduction <add>, %13, %cst_7 [0] : vector<4x128xf32> to vector<128xf32>
    %15 = vector.shape_cast %14 : vector<128xf32> to vector<1x128xf32>
    %16 = arith.addf %0, %9 : vector<1x128xf32>
    %17 = arith.addf %1, %15 : vector<1x128xf32>
    %cst_8 = arith.constant 2.500000e-01 : f32
    %18 = vector.broadcast %cst_8 : f32 to vector<1x128xf32>
    %19 = arith.mulf %16, %18 : vector<1x128xf32>
    %cst_9 = arith.constant 2.500000e-01 : f32
    %20 = vector.broadcast %cst_9 : f32 to vector<1x128xf32>
    %21 = arith.mulf %17, %20 : vector<1x128xf32>
    %22 = math.log %19 : vector<1x128xf32>
    %cst_10 = arith.constant 2.000000e+00 : f32
    %23 = math.log %cst_10 : f32
    %24 = vector.broadcast %23 : f32 to vector<1x128xf32>
    %25 = arith.divf %22, %24 : vector<1x128xf32>
    %26 = arith.subf %25, %21 : vector<1x128xf32>
    %27 = arith.mulf %26, %19 : vector<1x128xf32>
    %c0_11 = arith.constant 0 : index
    %c0_12 = arith.constant 0 : index
    %c0_13 = arith.constant 0 : index
    %28 = vector.load %arg3[%c0_11, %c0_12, %c0_13] : memref<1x1x128xf32, #tpu.memory_space<vmem>>, vector<1x1x128xf32>
    %29 = vector.shape_cast %28 : vector<1x1x128xf32> to vector<1x128xf32>
    %30 = vector.shape_cast %27 : vector<1x128xf32> to vector<1x1x128xf32>
    tpu.vector_store %arg3[%c0_11, %c0_12, %c0_13], %30 {strides = array<i32>} : memref<1x1x128xf32, #tpu.memory_space<vmem>>, vector<1x1x128xf32>,
    return
  }
  func.func @transform_0(%arg0: i32, %arg1: i32) -> (i32, i32, i32) {
    %c0_i32 = arith.constant 0 : i32
    %c0_i32_0 = arith.constant 0 : i32
    return %arg0, %c0_i32, %arg1 : i32, i32, i32
  }
  func.func @transform_1(%arg0: i32, %arg1: i32) -> (i32, i32, i32) {
    %c0_i32 = arith.constant 0 : i32
    %c0_i32_0 = arith.constant 0 : i32
    return %arg0, %c0_i32, %arg1 : i32, i32, i32
  }
}

</mosaic_0001>

<llo_original>
// kernel: tpu_custom_call.1
$region0: #{tpu_custom_call.1}
  #allocation0 [shape = 'u32[]', space=smem, size = 0x4, offset = 0x4, fixed_abs, tag = 'smem constant byte address 0x4 - core index']
  #allocation1 [shape = 'u32[144,128]{1,0:T(1,128)}', space=vmem, size = 0x12000, scoped, tag = 'internal scratch']
  %s0 = inlined_call_operand.hbm [shape: f32[2,4,256], index: 0, kind: input, shape index: {}]
  %s1 = inlined_call_operand.hbm [shape: f32[2,1,256], index: 1, kind: output, shape index: {}]
  %s2 = sld [smem:[#allocation0]]
  $region41: #{tpu_custom_call.1} parent=0
    _
  %s4 = ssub.s32 1, %s2
  %s5 = scalar_select 0, %s4, %s2
  $region1: #{tpu_custom_call.1} parent=0
    #allocation2 [shape = 'u8[4096]{0}', space=vmem, size = 0x1000, scoped, tag = 'input window, operand 0']
    #allocation3 [shape = 's32[2]{0}', space=sflag, size = 0x8, scoped, tag = 'scoped memory for tpu_custom_call.1']
    #allocation4 [shape = 's32[2]{0}', space=sflag, size = 0x8, scoped, tag = 'scoped memory for tpu_custom_call.1']
    #allocation5 [shape = 'u8[1024]{0}', space=vmem, size = 0x400, scoped, tag = 'output window, operand 0']
    %6 = vsyncpa [#allocation3], 0
    %s7 = scalar_lea.sflag [#allocation3], 1
    %8 = vsyncpa %s7, 0
    %9 = vsyncpa [#allocation4], 0
    %s10 = scalar_lea.sflag [#allocation4], 1
    %11 = vsyncpa %s10, 0
    loop: start=0, step=1, limit=6
    $region2: #{tpu_custom_call.1} parent=1 // loop_pre_header
      _
    $region3: #{tpu_custom_call.1} parent=1 // loop_header
      %s13 = sphi 0, %s17
      %p14 = scmp.ge.s32.totalorder %s13, 6
      %s20 = sphi 0, %s32
      %s21 = sphi 0, %s28
      %s22 = sphi 0, %s20
      %s23 = sphi 0, %s21
      %s24 = sphi 0, %s22
      %s25 = sphi 0, %s23
      %s37 = sphi 0, %s39
      %s40 = sphi 0, %s37
      %s41 = sphi 0, %s40
      %s57 = sphi 0, %s41
      %s65 = sphi 0, %s67
      %s68 = sphi 0, %s65
      %s69 = sphi 0, %s68
      %s85 = sphi 0, %s69
    $region4: #{tpu_custom_call.1} parent=1 // loop_header_branch
      %16 = sbr.rel (%p14) target = $region8
    $region5: #{tpu_custom_call.1} parent=1 // loop_body
      %s18 = ssub.s32 %s13, 1
      %s19 = ssub.s32 %s13, 2
      %s26 = sadd.s32 1, %s21
      %p27 = scmp.ge.s32.totalorder %s26, 2
      %s28 = scalar_select %p27, 0, %s26
      %s29 = sadd.s32 1, %s20
      %s30 = scalar_select %p27, %s29, %s20
      %p31 = scmp.ge.s32.totalorder %s30, 2
      %s32 = scalar_select %p31, 0, %s30
      %s33 = ssub.s32 %s20, %s32
      %s34 = ssub.s32 %s21, %s28
      %s35 = sor.u32 %s33, %s34
      %p36 = scmp.eq.s32.totalorder %s35, 0
      %s38 = sadd.s32 %s37, 1
      %s39 = scalar_select %p36, %s37, %s38
      %p42 = pneg %p36
      %p43 = scmp.eq.s32.totalorder %s13, 3
      %p44 = por %p42, %p43
      %p45 = scmp.ne.s32.totalorder %s37, %s40
      %p46 = scmp.eq.s32.totalorder %s13, 0
      %p47 = por %p45, %p46
      %p48 = scmp.ne.s32.totalorder %s37, %s40
      %p49 = scmp.eq.s32.totalorder %s18, 3
      %p50 = por %p48, %p49
      %p51 = scmp.ne.s32.totalorder %s40, %s41
      %p52 = scmp.eq.s32.totalorder %s18, 0
      %p53 = por %p51, %p52
      %p54 = scmp.ne.s32.totalorder %s40, %s41
      %p55 = scmp.eq.s32.totalorder %s19, 3
      %p56 = por %p54, %p55
      %p58 = scmp.ne.s32.totalorder %s41, %s57
      %p59 = scmp.eq.s32.totalorder %s19, 0
      %p60 = por %p58, %p59
      %s61 = ssub.s32 %s20, %s32
      %s62 = ssub.s32 %s21, %s28
      %s63 = sor.u32 %s61, %s62
      %p64 = scmp.eq.s32.totalorder %s63, 0
      %s66 = sadd.s32 %s65, 1
      %s67 = scalar_select %p64, %s65, %s66
      %p70 = pneg %p64
      %p71 = scmp.eq.s32.totalorder %s13, 3
      %p72 = por %p70, %p71
      %p73 = scmp.ne.s32.totalorder %s65, %s68
      %p74 = scmp.eq.s32.totalorder %s13, 0
      %p75 = por %p73, %p74
      %p76 = scmp.ne.s32.totalorder %s65, %s68
      %p77 = scmp.eq.s32.totalorder %s18, 3
      %p78 = por %p76, %p77
      %p79 = scmp.ne.s32.totalorder %s68, %s69
      %p80 = scmp.eq.s32.totalorder %s18, 0
      %p81 = por %p79, %p80
      %p82 = scmp.ne.s32.totalorder %s68, %s69
      %p83 = scmp.eq.s32.totalorder %s19, 3
      %p84 = por %p82, %p83
      %p86 = scmp.ne.s32.totalorder %s69, %s85
      %p87 = scmp.eq.s32.totalorder %s19, 0
      %p88 = por %p86, %p87
      %p89 = scmp.le.s32.totalorder 1, %s13
      %p90 = scmp.lt.s32.totalorder %s13, 5
      %p91 = pnand %p89, %p90
      %p92 = pneg %p91
      // Predicated region
      $region9: #{tpu_custom_call.1} parent=5 // pred_check
        _
      $region10: #{tpu_custom_call.1} parent=5 // pred_check_branch
        %94 = sbr.rel (%p91) target = $region12
      $region11: #{tpu_custom_call.1} parent=5 // pred_region
        %s95 = ssub.s32 %s13, 1
      $region12: #{tpu_custom_call.1} parent=5 // pred_fallthru
        _
      %p96 = scmp.lt.s32.totalorder %s13, 4
      // Predicated region
      $region13: #{tpu_custom_call.1} parent=5 // pred_check
        %p97 = pneg %p96
      $region14: #{tpu_custom_call.1} parent=5 // pred_check_branch
        %99 = sbr.rel (%p97) target = $region16
      $region15: #{tpu_custom_call.1} parent=5 // pred_region
        // Predicated region
        $region17: #{tpu_custom_call.1} parent=15 // pred_check
          %p100 = pneg %p47
        $region18: #{tpu_custom_call.1} parent=15 // pred_check_branch
          %102 = sbr.rel (%p100) target = $region20
        $region19: #{tpu_custom_call.1} parent=15 // pred_region
          %s103 = sand.u32 %s37, 1
          %s104 = scalar_lea.sflag [#allocation3], %s103
          %s105 = sand.u32 %s37, 1
          %s106 = smul.addr %s105, 4
          %s107 = scalar_lea.vmem [#allocation2], %s106
          %s109 = ssub.s32 64, 64
          %110 = vsyncadd %s104, %s109
          %s111 = smul.addr %s20, 2
          %s112 = sadd.s32 %s21, %s111
          %s113 = smul.addr %s112, 64
          %s114 = scalar_lea.hbm %s0, %s113
          %s116 = sshll.u32 %s107, 4
          %s117 = int_to_ptr.vmem [resolvable:$true] %s116
          %119 = dma.hbm_to_vmem [thread:$0]  %s114, 64, %s117, %s104
        $region20: #{tpu_custom_call.1} parent=15 // pred_fallthru
          _
      $region16: #{tpu_custom_call.1} parent=5 // pred_fallthru
        _
      %p120 = scmp.le.s32.totalorder 1, %s13
      %p121 = scmp.lt.s32.totalorder %s13, 5
      %p122 = pnand %p120, %p121
      %p123 = pneg %p122
      // Predicated region
      $region21: #{tpu_custom_call.1} parent=5 // pred_check
        _
      $region22: #{tpu_custom_call.1} parent=5 // pred_check_branch
        %125 = sbr.rel (%p122) target = $region24
      $region23: #{tpu_custom_call.1} parent=5 // pred_region
        %s126 = ssub.s32 %s13, 1
        %s127 = sand.u32 %s40, 1
        %s128 = scalar_lea.sflag [#allocation3], %s127
        %s129 = sand.u32 %s40, 1
        %s130 = smul.addr %s129, 4
        %s131 = scalar_lea.vmem [#allocation2], %s130
        // Predicated region
        $region25: #{tpu_custom_call.1} parent=23 // pred_check
          %p132 = pneg %p53
        $region26: #{tpu_custom_call.1} parent=23 // pred_check_branch
          %134 = sbr.rel (%p132) target = $region28
        $region27: #{tpu_custom_call.1} parent=23 // pred_region
          %135 = dma.done %s128, 64
        $region28: #{tpu_custom_call.1} parent=23 // pred_fallthru
          _
        %s136 = sand.u32 %s40, 1
        %s137 = scalar_lea.sflag [#allocation3], %s136
        %s138 = sand.u32 %s40, 1
        %s139 = smul.addr %s138, 4
        %s140 = scalar_lea.vmem [#allocation2], %s139
        %p141 = pneg %p53
        %p142 = pneg %p50
        %p143 = pneg %p81
        %p144 = pneg %p78
        %s145 = sand.u32 %s68, 1
        %s146 = scalar_lea.sflag [#allocation4], %s145
        %s147 = sand.u32 %s68, 1
        %s148 = scalar_lea.vmem [#allocation5], %s147
        %v149 = vld [vmem:[%s131] sm:$0xf]
        %v150 = vmax.f32 %v149, 0.0
        %v151 = vadd.f32 %v150, 1e-07
        %vm152 = vcmask 1043456
        %v153 = vsel %vm152, %v151, 0.0
        %v154 = vrot.slane %v153, 4
        %v155 = vadd.f32 %v153, %v154
        %v156 = vrot.slane %v155, 2
        %v157 = vadd.f32 %v155, %v156
        %v158 = vrot.slane %v157, 1
        %v159 = vadd.f32 %v157, %v158
        %v160 = vlog2.pop %v151
        %v161 = vmul.f32 %v160, 0.6931472
        %v162 = vrcp.pop 0.6931472
        %v163 = vmul.f32 %v161, %v162
        %v164 = vsel %vm152, %v163, 0.0
        %v165 = vrot.slane %v164, 4
        %v166 = vadd.f32 %v164, %v165
        %v167 = vrot.slane %v166, 2
        %v168 = vadd.f32 %v166, %v167
        %v169 = vrot.slane %v168, 1
        %v170 = vadd.f32 %v168, %v169
        %v171 = vadd.f32 %v159, 0.0
        %v172 = vadd.f32 %v170, 0.0
        %v173 = vmul.f32 %v171, 0.25
        %v174 = vmul.f32 %v172, 0.25
        %v175 = vlog2.pop %v173
        %v176 = vmul.f32 %v175, 0.6931472
        %v177 = vmul.f32 %v176, %v162
        %v178 = vsub.f32 %v177, %v174
        %v179 = vmul.f32 %v178, %v173
        %180 = vst [vmem:[%s148] sm:$0x1] %v179
        %s181 = sand.u32 %s68, 1
        %s182 = scalar_lea.sflag [#allocation4], %s181
        %s183 = sand.u32 %s68, 1
        %s184 = scalar_lea.vmem [#allocation5], %s183
        // Predicated region
        $region29: #{tpu_custom_call.1} parent=23 // pred_check
          %p185 = pneg %p78
        $region30: #{tpu_custom_call.1} parent=23 // pred_check_branch
          %187 = sbr.rel (%p185) target = $region32
        $region31: #{tpu_custom_call.1} parent=23 // pred_region
          %s189 = ssub.s32 16, 16
          %190 = vsyncadd %s182, %s189
          %s191 = smul.addr %s22, 2
          %s192 = sadd.s32 %s23, %s191
          %s193 = smul.addr %s192, 16
          %s194 = scalar_lea.hbm %s1, %s193
          %s196 = sshll.u32 %s184, 4
          %s197 = int_to_ptr.vmem [resolvable:$true] %s196
          %199 = dma.vmem_to_hbm [thread:$0]  %s197, 16, %s194, %s182
        $region32: #{tpu_custom_call.1} parent=23 // pred_fallthru
          _
      $region24: #{tpu_custom_call.1} parent=5 // pred_fallthru
        _
      %p200 = scmp.le.s32.totalorder 2, %s13
      // Predicated region
      $region33: #{tpu_custom_call.1} parent=5 // pred_check
        %p201 = pneg %p200
      $region34: #{tpu_custom_call.1} parent=5 // pred_check_branch
        %203 = sbr.rel (%p201) target = $region36
      $region35: #{tpu_custom_call.1} parent=5 // pred_region
        %s204 = ssub.s32 %s13, 2
        // Predicated region
        $region37: #{tpu_custom_call.1} parent=35 // pred_check
          %p205 = pneg %p84
        $region38: #{tpu_custom_call.1} parent=35 // pred_check_branch
          %207 = sbr.rel (%p205) target = $region40
        $region39: #{tpu_custom_call.1} parent=35 // pred_region
          %s208 = sand.u32 %s69, 1
          %s209 = scalar_lea.sflag [#allocation4], %s208
          %s210 = sand.u32 %s69, 1
          %s211 = scalar_lea.vmem [#allocation5], %s210
          %212 = dma.done %s209, 16
        $region40: #{tpu_custom_call.1} parent=35 // pred_fallthru
          _
      $region36: #{tpu_custom_call.1} parent=5 // pred_fallthru
        _
    $region6: #{tpu_custom_call.1} parent=1 // loop_footer
      %s17 = sadd.s32 1, %s13
    $region7: #{tpu_custom_call.1} parent=1 // loop_footer_branch
      %12 = sbr.rel target = $region3
    $region8: #{tpu_custom_call.1} parent=1 // loop_exit
      _
    %213 = vsyncpa [#allocation3], 1
    %s214 = scalar_lea.sflag [#allocation3], 1
    %215 = vsyncpa %s214, 1
    %216 = vsyncpa [#allocation4], 1
    %s217 = scalar_lea.sflag [#allocation4], 1
    %218 = vsyncpa %s217, 1

</llo_original>
